<compile_context>
chip_gen: v7x
topology: tpu7x:2x2x1
jax: 0.10.0
libtpu: 0.0.40
codegen_flags: <defaults>
</compile_context>

<pallas_src>
import functools

import jax
import jax.numpy as jnp
from jax import lax
from jax.experimental import pallas as pl
from jax.experimental.pallas import tpu as pltpu


def _inter_loss_kernel(inter_ref, intra_ref, xt_ref, out_ref, *,
                       pairs, use_bf16_matmul):
    """Processes `pairs` (pos, neg) pairs per grid step.

    inter_ref : VMEM (2N, 2N) f32  additive bias for the inter (max) term
    intra_ref : VMEM (2N, 2N) f32  additive bias for the intra (min) term
    xt_ref    : VMEM (P, 2N, D)    [pos | neg]^T per pair (samples as rows)
    out_ref   : SMEM (P, 1) f32    max_inter - min_intra per pair
    """
    inter_bias = inter_ref[...]          # resident; loaded once per step
    intra_bias = intra_ref[...]
    eps = jnp.float32(1e-12)

    for p in range(pairs):               # static unroll, P is small
        xp = xt_ref[p].astype(jnp.float32)                       # (2N, D)
        inv = lax.rsqrt(jnp.sum(xp * xp, axis=-1, keepdims=True) + eps)
        xpn = xp * inv                                           # l2-normalized rows
        if use_bf16_matmul:
            # bf16 operands hit the peak MXU path; accumulation stays f32.
            xpn = xpn.astype(jnp.bfloat16)
        # Self-contraction on the MXU: G = xpn @ xpn^T  (einsum 'md,nd->mn').
        g = lax.dot_general(xpn, xpn, (((1,), (1,)), ((), ())),
                            preferred_element_type=jnp.float32)  # (2N, 2N) f32
        max_inter = jnp.max(g + inter_bias)
        min_intra = jnp.min(g + intra_bias)
        out_ref[p, 0] = max_inter - min_intra


def _bias_matrices(n):
    """Additive bias matrices encoding the diagonal shifts / block masks."""
    two_n = 2 * n
    idx = jnp.arange(two_n, dtype=jnp.int32)
    row, col = idx[:, None], idx[None, :]
    same_block = (row < n) == (col < n)                  # PP and NN blocks
    cross_diag = (col == row + n) | (row == col + n)     # diagonal of PN / NP
    main_diag = row == col
    big = jnp.float32(1e30)                              # finite "exclude" value

    # Inter term: cross blocks only; diagonal shifted by -1 ("dot -= eye").
    inter = jnp.where(same_block, -big,
                      jnp.where(cross_diag, jnp.float32(-1.0), jnp.float32(0.0)))
    # Intra term: PP diag +100, NN diag +1; cross blocks excluded from the min.
    diag_boost = jnp.where(row < n, jnp.float32(100.0), jnp.float32(1.0))
    intra = jnp.where(same_block,
                      jnp.where(main_diag, diag_boost, jnp.float32(0.0)),
                      big)
    return inter.astype(jnp.float32), intra.astype(jnp.float32)


def _vmem_budget_bytes():
    # Physical VMEM differs per generation (v5e/v6e: 128 MiB, v7x: 64 MiB per
    # TC); leave ~25% headroom for Mosaic internal scratch & double-buffering.
    try:
        cap = int(pltpu.get_tpu_info().vmem_capacity_bytes)
    except Exception:
        cap = 64 << 20
    return (cap * 3) // 4


def _inter_loss_batched(pos, neg, delta, use_bf16_matmul, pairs_per_step):
    assert pos.shape == neg.shape and pos.ndim == 3
    b, d, n = pos.shape
    two_n = 2 * n

    # Single shipped layout: xt = [pos | neg]^T per pair (samples as rows).
    xt = jnp.concatenate(
        [jnp.swapaxes(pos, 1, 2), jnp.swapaxes(neg, 1, 2)], axis=1)  # (B, 2N, D)
    xt = xt.astype(jnp.float32)

    pairs = max(1, min(pairs_per_step, b))
    steps = -(-b // pairs)
    b_pad = steps * pairs
    if b_pad != b:
        xt = jnp.pad(xt, ((0, b_pad - b), (0, 0), (0, 0)))

    inter_bias, intra_bias = _bias_matrices(n)

    # Working-set estimate per grid step (bytes).
    per_step = (2 * pairs * two_n * d * 4          # xt block, double-buffered
                + 2 * 2 * two_n * two_n * 4        # resident bias matrices
                + 6 * two_n * two_n * 4            # gram + biased temporaries
                + 2 * pairs * two_n * d * 4)       # normalized / cast copies
    vmem_limit = int(min(max(per_step + (4 << 20), 8 << 20), _vmem_budget_bytes()))

    cost = pl.CostEstimate(
        flops=int(b_pad * (2 * two_n * two_n * d + 8 * two_n * two_n
                           + 4 * two_n * d)),
        transcendentals=int(b_pad * two_n),
        bytes_accessed=int(b_pad * two_n * d * 4 + 2 * two_n * two_n * 4
                           + b_pad * 4),
    )

    kernel = functools.partial(_inter_loss_kernel, pairs=pairs,
                               use_bf16_matmul=use_bf16_matmul)
    raw = pl.pallas_call(
        kernel,
        grid=(steps,),
        in_specs=[
            pl.BlockSpec((two_n, two_n), lambda i: (0, 0)),      # inter bias (resident)
            pl.BlockSpec((two_n, two_n), lambda i: (0, 0)),      # intra bias (resident)
            pl.BlockSpec((pairs, two_n, d), lambda i: (i, 0, 0)),  # xt chunk
        ],
        out_specs=pl.BlockSpec((pairs, 1), lambda i: (i, 0),
                               memory_space=pltpu.SMEM),
        out_shape=jax.ShapeDtypeStruct((b_pad, 1), jnp.float32),
        compiler_params=pltpu.CompilerParams(
            dimension_semantics=("parallel",),   # pair chunks shard across TCs
            vmem_limit_bytes=vmem_limit,
        ),
        cost_estimate=cost,
    )(inter_bias, intra_bias, xt)

    # delta + relu epilogue in the wrapper keeps the kernel delta-free.
    return jnp.maximum(raw[:b, 0] + jnp.float32(delta), jnp.float32(0.0))


def inter_loss(pos, neg, delta, *, use_bf16_matmul=False, pairs_per_step=8):
    """pos, neg: (D, N) or (B, D, N). Returns scalar or (B,) f32 losses."""
    if pos.ndim == 2:
        return _inter_loss_batched(pos[None], neg[None], delta,
                                   use_bf16_matmul, pairs_per_step)[0]
    return _inter_loss_batched(pos, neg, delta, use_bf16_matmul, pairs_per_step)


def _reference(pos, neg, delta):
    # Pure-JAX mirror of the PyTorch forward, for sanity checking.
    pos = pos / jnp.sqrt(jnp.sum(pos * pos, axis=0, keepdims=True) + 1e-12)
    neg = neg / jnp.sqrt(jnp.sum(neg * neg, axis=0, keepdims=True) + 1e-12)
    n = pos.shape[1]
    eye = jnp.eye(n, dtype=jnp.float32)
    max_inter = jnp.max(pos.T @ neg - eye)
    min_intra = jnp.min(pos.T @ pos + 100.0 * eye)
    min_intra = jnp.minimum(min_intra, jnp.min(neg.T @ neg + eye))
    return jnp.maximum(max_inter - min_intra + delta, 0.0)


if __name__ == "__main__":
    key = jax.random.PRNGKey(0)
    k1, k2 = jax.random.split(key)
    B, D, N = 4, 32, 16      # (num_pairs, feature_dim, num_samples)
    delta = 0.5              # module hyperparameter

    pos_b = jax.random.normal(k1, (B, D, N), dtype=jnp.float32)
    neg_b = jax.random.normal(k2, (B, D, N), dtype=jnp.float32)
    refs = jnp.stack([_reference(pos_b[i], neg_b[i], delta) for i in range(B)])

    # Single-pair path (matches the PyTorch module signature).
    loss0 = jax.block_until_ready(inter_loss(pos_b[0], neg_b[0], delta))
    assert jnp.allclose(loss0, refs[0], atol=1e-4, rtol=1e-4), (loss0, refs[0])

    # Batched path: all pairs land in one grid step (pairs_per_step >= B).
    losses = jax.block_until_ready(inter_loss(pos_b, neg_b, delta))
    assert jnp.allclose(losses, refs, atol=1e-4, rtol=1e-4), (losses, refs)

    # Batched path exercising batch padding (pairs_per_step does not divide B).
    losses_p = jax.block_until_ready(
        inter_loss(pos_b, neg_b, delta, pairs_per_step=3))
    assert jnp.allclose(losses_p, refs, atol=1e-4, rtol=1e-4), (losses_p, refs)

    # bf16 MXU operands (f32 accumulation): looser tolerance by construction.
    losses_bf16 = jax.block_until_ready(
        inter_loss(pos_b, neg_b, delta, use_bf16_matmul=True))
    assert jnp.allclose(losses_bf16, refs, atol=5e-2, rtol=0), (losses_bf16, refs)

    print("KERNEL_OK")
</pallas_src>

<mosaic_0001>
module attributes {stable_mosaic.version = 11 : i64} {
  func.func @_inter_loss_kernel(%arg0: i32, %arg1: memref<32x32xf32, #tpu.memory_space<vmem>>, %arg2: memref<32x32xf32, #tpu.memory_space<vmem>>, %arg3: memref<1x32x32xf32, #tpu.memory_space<vmem>>, %arg4: memref<1x1xf32, #tpu.memory_space<smem>>) attributes {dimension_semantics = [#tpu.dimension_semantics<parallel>], iteration_bounds = array<i64: 1>, scalar_prefetch = 0 : i64, scratch_operands = 0 : i64, tpu.core_type = #tpu.core_type<tc>, window_params = [{pipeline_mode = #tpu.pipeline_mode<synchronous>, transform_indices = @transform_0, window_bounds = array<i64: 32, 32>}, {pipeline_mode = #tpu.pipeline_mode<synchronous>, transform_indices = @transform_1, window_bounds = array<i64: 32, 32>}, {transform_indices = @transform_2, window_bounds = array<i64: 1, 32, 32>}, {transform_indices = @transform_3, window_bounds = array<i64: 1, 1>}]} {
    %c0 = arith.constant 0 : index
    %c0_0 = arith.constant 0 : index
    %0 = vector.load %arg1[%c0, %c0_0] : memref<32x32xf32, #tpu.memory_space<vmem>>, vector<32x32xf32>
    %c0_1 = arith.constant 0 : index
    %c0_2 = arith.constant 0 : index
    %1 = vector.load %arg2[%c0_1, %c0_2] : memref<32x32xf32, #tpu.memory_space<vmem>>, vector<32x32xf32>
    %c0_3 = arith.constant 0 : index
    %c0_4 = arith.constant 0 : index
    %c0_5 = arith.constant 0 : index
    %2 = vector.load %arg3[%c0_3, %c0_4, %c0_5] : memref<1x32x32xf32, #tpu.memory_space<vmem>>, vector<1x32x32xf32>
    %3 = vector.shape_cast %2 : vector<1x32x32xf32> to vector<32x32xf32>
    %4 = arith.mulf %3, %3 : vector<32x32xf32>
    %cst = arith.constant dense<0.000000e+00> : vector<32xf32>
    %5 = vector.multi_reduction <add>, %4, %cst [1] : vector<32x32xf32> to vector<32xf32>
    %6 = vector.shape_cast %5 : vector<32xf32> to vector<32x1xf32>
    %cst_6 = arith.constant 9.99999996E-13 : f32
    %7 = vector.broadcast %cst_6 : f32 to vector<32x1xf32>
    %8 = arith.addf %6, %7 : vector<32x1xf32>
    %9 = math.rsqrt %8 : vector<32x1xf32>
    %10 = vector.broadcast %9 : vector<32x1xf32> to vector<32x32xf32>
    %11 = arith.mulf %3, %10 : vector<32x32xf32>
    %cst_7 = arith.constant dense<0.000000e+00> : vector<32x32xf32>
    %12 = tpu.matmul %11, %11, %cst_7 {dimension_numbers = #tpu.dot_dimension_numbers<[1], [1], [0], [0], [0, 0, 1, 0], [], []>} : vector<32x32xf32>, vector<32x32xf32>, vector<32x32xf32> -> vector<32x32xf32>
    %13 = arith.addf %12, %0 : vector<32x32xf32>
    %14 = vector.shape_cast %13 : vector<32x32xf32> to vector<1x32x32xf32>
    %cst_8 = arith.constant dense<0xFF800000> : vector<1xf32>
    %15 = vector.multi_reduction <maximumf>, %14, %cst_8 [1, 2] : vector<1x32x32xf32> to vector<1xf32>
    %16 = vector.shape_cast %15 : vector<1xf32> to vector<1x1x1xf32>
    %17 = vector.extract %16[0, 0, 0] : f32 from vector<1x1x1xf32>
    %18 = arith.addf %12, %1 : vector<32x32xf32>
    %19 = vector.shape_cast %18 : vector<32x32xf32> to vector<1x32x32xf32>
    %cst_9 = arith.constant dense<0x7F800000> : vector<1xf32>
    %20 = vector.multi_reduction <minimumf>, %19, %cst_9 [1, 2] : vector<1x32x32xf32> to vector<1xf32>
    %21 = vector.shape_cast %20 : vector<1xf32> to vector<1x1x1xf32>
    %22 = vector.extract %21[0, 0, 0] : f32 from vector<1x1x1xf32>
    %23 = arith.subf %17, %22 : f32
    %c0_10 = arith.constant 0 : index
    %c0_11 = arith.constant 0 : index
    %24 = memref.load %arg4[%c0_10, %c0_11] : memref<1x1xf32, #tpu.memory_space<smem>>
    memref.store %23, %arg4[%c0_10, %c0_11] : memref<1x1xf32, #tpu.memory_space<smem>>
    return
  }
  func.func @transform_0(%arg0: i32) -> (i32, i32) {
    %c0_i32 = arith.constant 0 : i32
    %c0_i32_0 = arith.constant 0 : i32
    %c0_i32_1 = arith.constant 0 : i32
    return %c0_i32, %c0_i32_0 : i32, i32
  }
  func.func @transform_1(%arg0: i32) -> (i32, i32) {
    %c0_i32 = arith.constant 0 : i32
    %c0_i32_0 = arith.constant 0 : i32
    %c0_i32_1 = arith.constant 0 : i32
    return %c0_i32, %c0_i32_0 : i32, i32
  }
  func.func @transform_2(%arg0: i32) -> (i32, i32, i32) {
    %c0_i32 = arith.constant 0 : i32
    %c0_i32_0 = arith.constant 0 : i32
    %c0_i32_1 = arith.constant 0 : i32
    return %arg0, %c0_i32, %c0_i32_0 : i32, i32, i32
  }
  func.func @transform_3(%arg0: i32) -> (i32, i32) {
    %c0_i32 = arith.constant 0 : i32
    %c0_i32_0 = arith.constant 0 : i32
    return %arg0, %c0_i32 : i32, i32
  }
}

</mosaic_0001>

<llo_original>
// kernel: tpu_custom_call.1
$region0: #{tpu_custom_call.1}
  #allocation0 [shape = 'u32[]', space=smem, size = 0x4, offset = 0x4, fixed_abs, tag = 'smem constant byte address 0x4 - core index']
  #allocation1 [shape = 'u32[144,128]{1,0:T(1,128)}', space=vmem, size = 0x12000, scoped, tag = 'internal scratch']
  %s0 = inlined_call_operand.hbm [shape: f32[32,32], index: 0, kind: input, shape index: {}]
  %s1 = inlined_call_operand.hbm [shape: f32[32,32], index: 1, kind: input, shape index: {}]
  %s2 = inlined_call_operand.hbm [shape: f32[1,32,32], index: 2, kind: input, shape index: {}]
  %s3 = inlined_call_operand.hbm [shape: f32[1,1], index: 3, kind: output, shape index: {}]
  %s4 = sld [smem:[#allocation0]]
  $region34: #{tpu_custom_call.1} parent=0
    _
  %s6 = ssub.s32 1, %s4
  %s7 = scalar_select 0, %s6, %s4
  $region1: #{tpu_custom_call.1} parent=0
    #allocation2 [shape = 'u8[16384]{0}', space=vmem, size = 0x4000, scoped, tag = 'input window, operand 0, single buffered']
    #allocation3 [shape = 's32[1]{0}', space=sflag, size = 0x4, scoped, tag = 'scoped memory for tpu_custom_call.1']
    #allocation4 [shape = 's32[1]{0}', space=sflag, size = 0x4, scoped, tag = 'scoped memory for tpu_custom_call.1']
    #allocation5 [shape = 'u8[16384]{0}', space=vmem, size = 0x4000, scoped, tag = 'input window, operand 1, single buffered']
    #allocation6 [shape = 's32[1]{0}', space=sflag, size = 0x4, scoped, tag = 'scoped memory for tpu_custom_call.1']
    #allocation7 [shape = 'u8[16384]{0}', space=vmem, size = 0x4000, scoped, tag = 'input window, operand 2, single buffered']
    #allocation8 [shape = 'u8[512]{0}', space=smem, size = 0x200, scoped, tag = 'output window, operand 0, single buffered']
    %8 = vsyncpa [#allocation3], 0
    %9 = vsyncpa [#allocation6], 0
    %10 = vsyncpa [#allocation4], 0
    // Predicated region
    $region2: #{tpu_custom_call.1} parent=1 // pred_check
      _
    $region3: #{tpu_custom_call.1} parent=1 // pred_check_branch
      %12 = sbr.rel (0) target = $region5
    $region4: #{tpu_custom_call.1} parent=1 // pred_region
      %s14 = ssub.s32 512, 512
      %15 = vsyncadd [#allocation3], %s14
      %s16 = sshll.u32 [#allocation2], 4
      %s17 = int_to_ptr.vmem [resolvable:$true] %s16
      %22 = dma.hbm_to_vmem [thread:$0]  %s0, 512, %s17, [#allocation3], 128, 128, 8
    $region5: #{tpu_custom_call.1} parent=1 // pred_fallthru
      _
    // Predicated region
    $region6: #{tpu_custom_call.1} parent=1 // pred_check
      _
    $region7: #{tpu_custom_call.1} parent=1 // pred_check_branch
      %24 = sbr.rel (0) target = $region9
    $region8: #{tpu_custom_call.1} parent=1 // pred_region
      %s26 = ssub.s32 512, 512
      %27 = vsyncadd [#allocation6], %s26
      %s28 = sshll.u32 [#allocation5], 4
      %s29 = int_to_ptr.vmem [resolvable:$true] %s28
      %34 = dma.hbm_to_vmem [thread:$0]  %s1, 512, %s29, [#allocation6], 128, 128, 8
    $region9: #{tpu_custom_call.1} parent=1 // pred_fallthru
      _
    // Predicated region
    $region10: #{tpu_custom_call.1} parent=1 // pred_check
      _
    $region11: #{tpu_custom_call.1} parent=1 // pred_check_branch
      %36 = sbr.rel (0) target = $region13
    $region12: #{tpu_custom_call.1} parent=1 // pred_region
      %s38 = ssub.s32 512, 512
      %39 = vsyncadd [#allocation6], %s38
      %s40 = sshll.u32 [#allocation7], 4
      %s41 = int_to_ptr.vmem [resolvable:$true] %s40
      %46 = dma.hbm_to_vmem [thread:$0]  %s2, 512, %s41, [#allocation6], 128, 128, 8
    $region13: #{tpu_custom_call.1} parent=1 // pred_fallthru
      _
    // Predicated region
    $region14: #{tpu_custom_call.1} parent=1 // pred_check
      _
    $region15: #{tpu_custom_call.1} parent=1 // pred_check_branch
      %48 = sbr.rel (0) target = $region17
    $region16: #{tpu_custom_call.1} parent=1 // pred_region
      %49 = dma.done [#allocation3], 512
    $region17: #{tpu_custom_call.1} parent=1 // pred_fallthru
      _
    // Predicated region
    $region18: #{tpu_custom_call.1} parent=1 // pred_check
      _
    $region19: #{tpu_custom_call.1} parent=1 // pred_check_branch
      %51 = sbr.rel (0) target = $region21
    $region20: #{tpu_custom_call.1} parent=1 // pred_region
      %52 = dma.done [#allocation6], 512
    $region21: #{tpu_custom_call.1} parent=1 // pred_fallthru
      _
    // Predicated region
    $region22: #{tpu_custom_call.1} parent=1 // pred_check
      _
    $region23: #{tpu_custom_call.1} parent=1 // pred_check_branch
      %54 = sbr.rel (0) target = $region25
    $region24: #{tpu_custom_call.1} parent=1 // pred_region
      %55 = dma.done [#allocation6], 512
    $region25: #{tpu_custom_call.1} parent=1 // pred_fallthru
      _
    %v56 = vld [vmem:[#allocation2] sm:$0xff]
    %v57 = vld [vmem:[#allocation2 + $0x8] sm:$0xff]
    %v58 = vld [vmem:[#allocation2 + $0x10] sm:$0xff]
    %v59 = vld [vmem:[#allocation2 + $0x18] sm:$0xff]
    %v60 = vld [vmem:[#allocation5] sm:$0xff]
    %v61 = vld [vmem:[#allocation5 + $0x8] sm:$0xff]
    %v62 = vld [vmem:[#allocation5 + $0x10] sm:$0xff]
    %v63 = vld [vmem:[#allocation5 + $0x18] sm:$0xff]
    %v64 = vld [vmem:[#allocation7] sm:$0xff]
    %v65 = vld [vmem:[#allocation7 + $0x8] sm:$0xff]
    %v66 = vld [vmem:[#allocation7 + $0x10] sm:$0xff]
    %v67 = vld [vmem:[#allocation7 + $0x18] sm:$0xff]
    %v68 = vmul.f32 %v64, %v64
    %v69 = vmul.f32 %v65, %v65
    %v70 = vmul.f32 %v66, %v66
    %v71 = vmul.f32 %v67, %v67
    %vm72 = vcmask 261120
    %v73 = vsel %vm72, %v68, 0.0
    %74 = vadd.xlane.f32.xlu0 %v73
    %v75 = vpop.xlane.xlu0 %74
    %v76 = vsel %vm72, %v69, 0.0
    %77 = vadd.xlane.f32.xlu0 %v76
    %v78 = vpop.xlane.xlu0 %77
    %v79 = vsel %vm72, %v70, 0.0
    %80 = vadd.xlane.f32.xlu0 %v79
    %v81 = vpop.xlane.xlu0 %80
    %v82 = vsel %vm72, %v71, 0.0
    %83 = vadd.xlane.f32.xlu0 %v82
    %v84 = vpop.xlane.xlu0 %83
    %v85 = vadd.f32 %v75, 1e-12
    %v86 = vadd.f32 %v78, 1e-12
    %v87 = vadd.f32 %v81, 1e-12
    %v88 = vadd.f32 %v84, 1e-12
    %v89 = vrsqrt.pop %v85
    %v90 = vrsqrt.pop %v86
    %v91 = vrsqrt.pop %v87
    %v92 = vrsqrt.pop %v88
    %v93 = vmul.f32 %v64, %v89
    %v94 = vmul.f32 %v65, %v90
    %v95 = vmul.f32 %v66, %v91
    %v96 = vmul.f32 %v67, %v92
    %v98 = vsel %vm72, %v93, 0
    %v101 = vsel %vm72, %v94, 0
    %v104 = vsel %vm72, %v95, 0
    %v107 = vsel %vm72, %v96, 0
    %109 = vmatprep.subr.mxu0 0.0
    %110 = vmatpush1.xpose.msra.mxu0 %v98
    %111 = vmatprep.subr.mxu0 0.0
    %112 = vmatpush1.xpose.msra.mxu0 %v101
    %113 = vmatprep.subr.mxu0 0.0
    %114 = vmatpush1.xpose.msra.mxu0 %v104
    %115 = vmatprep.subr.mxu0 0.0
    %116 = vmatpush1.xpose.msra.mxu0 %v107
    %117 = vmatprep.subr.mxu0 0.0
    %118 = vmatpush1.xpose.msra.mxu0 0.0
    %119 = vmatprep.subr.mxu0 0.0
    %120 = vmatpush1.xpose.msra.mxu0 0.0
    %121 = vmatprep.subr.mxu0 0.0
    %122 = vmatpush1.xpose.msra.mxu0 0.0
    %123 = vmatprep.subr.mxu0 0.0
    %124 = vmatpush1.xpose.msra.mxu0 0.0
    %125 = vmatprep.subr.mxu0 0.0
    %126 = vmatpush1.xpose.msra.mxu0 0.0
    %127 = vmatprep.subr.mxu0 0.0
    %128 = vmatpush1.xpose.msra.mxu0 0.0
    %129 = vmatprep.subr.mxu0 0.0
    %130 = vmatpush1.xpose.msra.mxu0 0.0
    %131 = vmatprep.subr.mxu0 0.0
    %132 = vmatpush1.xpose.msra.mxu0 0.0
    %133 = vmatprep.subr.mxu0 0.0
    %134 = vmatpush1.xpose.msra.mxu0 0.0
    %135 = vmatprep.subr.mxu0 0.0
    %136 = vmatpush1.xpose.msra.mxu0 0.0
    %137 = vmatprep.subr.mxu0 0.0
    %138 = vmatpush1.xpose.msra.mxu0 0.0
    %139 = vmatprep.subr.mxu0 0.0
    %140 = vmatpush1.xpose.msra.mxu0 0.0
    %141 = vmatprep.subr.mxu0 0.0
    %142 = vmatpush1.xpose.msra.mxu0 0.0
    %143 = vmatprep.subr.mxu0 0.0
    %144 = vmatpush1.xpose.msra.mxu0 0.0
    %145 = vmatprep.subr.mxu0 0.0
    %146 = vmatpush1.xpose.msra.mxu0 0.0
    %147 = vmatprep.subr.mxu0 0.0
    %148 = vmatpush1.xpose.msra.mxu0 0.0
    %149 = vmatprep.subr.mxu0 0.0
    %150 = vmatpush1.xpose.msra.mxu0 0.0
    %151 = vmatprep.subr.mxu0 0.0
    %152 = vmatpush1.xpose.msra.mxu0 0.0
    %153 = vmatprep.subr.mxu0 0.0
    %154 = vmatpush1.xpose.msra.mxu0 0.0
    %155 = vmatprep.subr.mxu0 0.0
    %156 = vmatpush1.xpose.msra.mxu0 0.0
    %157 = vmatprep.subr.mxu0 0.0
    %158 = vmatpush1.xpose.msra.mxu0 0.0
    %159 = vmatprep.subr.mxu0 0.0
    %160 = vmatpush1.xpose.msra.mxu0 0.0
    %161 = vmatprep.subr.mxu0 0.0
    %162 = vmatpush1.xpose.msra.mxu0 0.0
    %163 = vmatprep.subr.mxu0 0.0
    %164 = vmatpush1.xpose.msra.mxu0 0.0
    %165 = vmatprep.subr.mxu0 0.0
    %166 = vmatpush1.xpose.msra.mxu0 0.0
    %167 = vmatprep.subr.mxu0 0.0
    %168 = vmatpush1.xpose.msra.mxu0 0.0
    %169 = vmatprep.subr.mxu0 0.0
    %170 = vmatpush1.xpose.msra.mxu0 0.0
    %171 = vmatprep.subr.mxu0 0.0
    %172 = vmatpush1.xpose.msra.mxu0 0.0
    %173 = vmatprep.mubr.f32.mxu0 0.0
    %174 = vmatmul.mubr.f32.gmra.mrb[0].mxu0 %v98
    %v175 = vpop.f32.mrb[0].mxu0
    %v176 = vadd.f32 0.0, %v175
    %v177 = vpop.f32.mrb[0].mxu0
    %178 = vmatprep.mubr.f32.mxu0 0.0
    %179 = vmatmul.mubr.f32.gmra.mrb[0].mxu0 %v101
    %v180 = vpop.f32.mrb[0].mxu0
    %v181 = vadd.f32 0.0, %v180
    %v182 = vpop.f32.mrb[0].mxu0
    %183 = vmatprep.mubr.f32.mxu0 0.0
    %184 = vmatmul.mubr.f32.gmra.mrb[0].mxu0 %v104
    %v185 = vpop.f32.mrb[0].mxu0
    %v186 = vadd.f32 0.0, %v185
    %v187 = vpop.f32.mrb[0].mxu0
    %188 = vmatprep.mubr.f32.mxu0 0.0
    %189 = vmatmul.mubr.f32.gmra.mrb[0].mxu0 %v107
    %v190 = vpop.f32.mrb[0].mxu0
    %v191 = vadd.f32 0.0, %v190
    %v192 = vpop.f32.mrb[0].mxu0
    %193 = vdwg.mxu0
    %v194 = vadd.f32 %v176, %v56
    %v195 = vadd.f32 %v181, %v57
    %v196 = vadd.f32 %v186, %v58
    %v197 = vadd.f32 %v191, %v59
    %v198 = vsel %vm72, %v194, -inf
    %v199 = vsel %vm72, %v195, -inf
    %v200 = vsel %vm72, %v196, -inf
    %v201 = vsel %vm72, %v197, -inf
    %v202 = vmax.f32 %v198, %v199
    %v203 = vmax.f32 %v200, %v201
    %v204 = vmax.f32 %v202, %v203
    %205 = vmax.xlane.f32.xlu0 %v204
    %v206 = vpop.xlane.xlu0 %205
    %v207 = vrot.slane %v206, 4
    %v208 = vmax.f32 %v206, %v207
    %v209 = vrot.slane %v208, 2
    %v210 = vmax.f32 %v208, %v209
    %v211 = vrot.slane %v210, 1
    %v212 = vmax.f32 %v210, %v211
    %s213 = vtos %v212
    %v214 = vadd.f32 %v176, %v60
    %v215 = vadd.f32 %v181, %v61
    %v216 = vadd.f32 %v186, %v62
    %v217 = vadd.f32 %v191, %v63
    %v218 = vsel %vm72, %v214, inf
    %v219 = vsel %vm72, %v215, inf
    %v220 = vsel %vm72, %v216, inf
    %v221 = vsel %vm72, %v217, inf
    %v222 = vmin.f32 %v218, %v219
    %v223 = vmin.f32 %v220, %v221
    %v224 = vmin.f32 %v222, %v223
    %225 = vmin.xlane.f32.xlu0 %v224
    %v226 = vpop.xlane.xlu0 %225
    %v227 = vrot.slane %v226, 4
    %v228 = vmin.f32 %v226, %v227
    %v229 = vrot.slane %v228, 2
    %v230 = vmin.f32 %v228, %v229
    %v231 = vrot.slane %v230, 1
    %v232 = vmin.f32 %v230, %v231
    %s233 = vtos %v232
    %s234 = ssub.f32 %s213, %s233
    %s235 = scalar_lea.smem [#allocation8], 0
    %236 = sst [smem:[%s235]] %s234
    // Predicated region
    $region26: #{tpu_custom_call.1} parent=1 // pred_check
      _
    $region27: #{tpu_custom_call.1} parent=1 // pred_check_branch
      %238 = sbr.rel (0) target = $region29
    $region28: #{tpu_custom_call.1} parent=1 // pred_region
      %s240 = ssub.s32 16, 16
      %241 = vsyncadd [#allocation4], %s240
      %244 = dma.smem_to_hbm [#allocation8], 16, %s3, [#allocation4]
    $region29: #{tpu_custom_call.1} parent=1 // pred_fallthru
      _
    // Predicated region
    $region30: #{tpu_custom_call.1} parent=1 // pred_check
      _
    $region31: #{tpu_custom_call.1} parent=1 // pred_check_branch
      %246 = sbr.rel (0) target = $region33
    $region32: #{tpu_custom_call.1} parent=1 // pred_region
      %247 = dma.done [#allocation4], 16
    $region33: #{tpu_custom_call.1} parent=1 // pred_fallthru
      _
    %248 = sfence
    %249 = vsyncpa [#allocation3], 1
    %250 = vsyncpa [#allocation6], 1
    %251 = vsyncpa [#allocation4], 1

</llo_original>
